<compile_context>
chip_gen: v5e
topology: v5e:2x2
jax: 0.10.0
libtpu: 0.0.40
codegen_flags: <defaults>
</compile_context>

<pallas_src>
import functools

import jax
import jax.numpy as jnp
from jax.experimental import pallas as pl
from jax.experimental.pallas import tpu as pltpu

_LANE = 128


def _int_pow(base, exp):
    """base ** exp for a non-negative Python int exp via repeated multiplication (VPU-only,
    avoids the exp/log EUP pair of a generic pow and the 0*inf NaN hazard)."""
    exp = int(exp)
    if exp == 0:
        return jnp.ones_like(base)
    result = None
    b = base
    e = exp
    while e:
        if e & 1:
            result = b if result is None else result * b
        e >>= 1
        if e:
            b = b * b
    return result


def _asl_kernel(x_ref, y_ref, o_ref, *, gamma_pos, gamma_neg, clip, eps, binary_targets):
    """Elementwise ASL loss on one (row_tile, col_tile) block.

    Mirrors AsymmetricLossOptimized.forward (returns -loss elementwise):
      xs_pos = sigmoid(x); xs_neg = 1 - xs_pos (+clip, clamped to 1)
      loss   = y*log(max(xs_pos,eps)) + (1-y)*log(max(xs_neg,eps))
      loss  *= (1 - xs_pos*y - xs_neg*(1-y)) ** (gamma_pos*y + gamma_neg*(1-y))
      return -loss
    """
    x = x_ref[...].astype(jnp.float32)
    y = y_ref[...].astype(jnp.float32)

    xs_pos = jax.nn.sigmoid(x)
    xs_neg = 1.0 - xs_pos
    if clip is not None and clip > 0:
        xs_neg = jnp.minimum(xs_neg + clip, 1.0)           # .add_(clip).clamp_(max=1)

    use_focal = (gamma_neg > 0) or (gamma_pos > 0)
    int_gammas = (float(gamma_pos).is_integer() and float(gamma_neg).is_integer()
                  and gamma_pos >= 0 and gamma_neg >= 0)

    if binary_targets:
        # Binarized multi-label targets (y in {0,1}): fuse the two log terms into one
        # select (1 EUP log instead of 2); for integer gammas replace pow (exp+log on
        # the EUP) with a couple of VPU multiplies.
        is_pos = y > 0.0
        p = jnp.where(is_pos, xs_pos, xs_neg)
        loss = jnp.log(jnp.maximum(p, eps))
        if use_focal:
            base = 1.0 - p                                  # = 1-xs_pos (y=1) | 1-xs_neg (y=0)
            if int_gammas:
                w = jnp.where(is_pos,
                              _int_pow(base, gamma_pos),
                              _int_pow(base, gamma_neg))
            else:
                w = jnp.power(base, jnp.where(is_pos, gamma_pos, gamma_neg))
            loss = loss * w
    else:
        # General, soft-target-safe formula (identical to the PyTorch module).
        anti = 1.0 - y
        loss = y * jnp.log(jnp.maximum(xs_pos, eps))
        loss = loss + anti * jnp.log(jnp.maximum(xs_neg, eps))
        if use_focal:
            base = 1.0 - xs_pos * y - xs_neg * anti
            loss = loss * jnp.power(base, gamma_pos * y + gamma_neg * anti)

    o_ref[...] = (-loss).astype(o_ref.dtype)


def _round_up(v, m):
    return -(-v // m) * m


def asymmetric_loss_optimized(x, y, *, gamma_neg=4, gamma_pos=1, clip=0.05, eps=1e-8,
                              assume_binary_targets=True,
                              block_budget_bytes=2 * 1024 * 1024):
    """JAX/Pallas equivalent of AsymmetricLossOptimized.forward(x, y).

    Returns the elementwise loss (-loss), same shape and dtype as x (as in the spec).
    Set assume_binary_targets=False if y may contain soft (non-{0,1}) values.
    """
    orig_shape = x.shape
    out_dtype = x.dtype

    # Flatten to a contiguous 2-D view (free reshape, no transpose / HBM copy).
    cols = orig_shape[-1] if x.ndim >= 1 else 1
    x2 = x.reshape(-1, cols)
    y2 = y.reshape(-1, cols)
    R, C = x2.shape

    # Sublane unit: 8 for f32, 16 for bf16, 32 for int8 blocks.
    min_itemsize = min(x2.dtype.itemsize, y2.dtype.itemsize, jnp.dtype(out_dtype).itemsize)
    row_unit = max(8, 32 // int(min_itemsize))

    # ---- column block --------------------------------------------------------------
    col_padded = False
    Cp = C
    if C % _LANE == 0:
        bc = min(C, 2048)                      # lane-dense; rows fill the byte budget below
    elif C * 4 * row_unit <= 2 * block_budget_bytes:
        # Typical multi-label case (num_labels not a multiple of 128): take the FULL last
        # dim as the block ("full extent" is exempt from the 128-divisibility rule) and
        # tile only rows.  Masked partial-lane stores beat a 2x-traffic pad round trip.
        bc = C
    else:
        # Rare: huge unaligned last dim -> pad columns up to the lane grid.
        Cp = _round_up(C, _LANE)
        x2 = jnp.pad(x2, ((0, 0), (0, Cp - C)))
        y2 = jnp.pad(y2, ((0, 0), (0, Cp - C)))
        col_padded = True
        bc = min(Cp, 2048)

    # ---- row block: byte-budgeted (~2 MiB per f32 compute block) --------------------
    rows_budget = max(row_unit, (block_budget_bytes // (bc * 4)) // row_unit * row_unit)
    if rows_budget >= R:
        if R >= 2 * row_unit:
            # Keep >= 2 blocks so both TensorCores on v7x get work.
            br = _round_up(-(-R // 2), row_unit)
        else:
            br = R                             # tiny input: single full-extent row block
    else:
        br = rows_budget

    grid = (pl.cdiv(R, br), pl.cdiv(Cp, bc))   # boundary blocks are cropped by Pallas

    kernel = functools.partial(
        _asl_kernel,
        gamma_pos=float(gamma_pos),
        gamma_neg=float(gamma_neg),
        clip=None if clip is None else float(clip),
        eps=float(eps),
        binary_targets=bool(assume_binary_targets),
    )

    n_elem = R * Cp
    bytes_accessed = n_elem * (x2.dtype.itemsize + y2.dtype.itemsize
                               + jnp.dtype(out_dtype).itemsize)
    transcendentals = (3 if assume_binary_targets else 6) * n_elem

    out = pl.pallas_call(
        kernel,
        out_shape=jax.ShapeDtypeStruct((R, Cp), out_dtype),
        grid=grid,
        in_specs=[
            pl.BlockSpec((br, bc), lambda i, j: (i, j)),
            pl.BlockSpec((br, bc), lambda i, j: (i, j)),
        ],
        out_specs=pl.BlockSpec((br, bc), lambda i, j: (i, j)),
        compiler_params=pltpu.CompilerParams(
            dimension_semantics=("parallel", "parallel"),
        ),
        cost_estimate=pl.CostEstimate(
            flops=12 * n_elem,
            transcendentals=transcendentals,
            bytes_accessed=bytes_accessed,
        ),
    )(x2, y2)

    if col_padded:
        out = out[:, :C]
    return out.reshape(orig_shape)


def _reference(x, y, gamma_neg=4, gamma_pos=1, clip=0.05, eps=1e-8):
    """Pure-JAX reference mirroring the PyTorch module exactly (general formula)."""
    x = x.astype(jnp.float32)
    y = y.astype(jnp.float32)
    anti = 1.0 - y
    xs_pos = jax.nn.sigmoid(x)
    xs_neg = 1.0 - xs_pos
    if clip is not None and clip > 0:
        xs_neg = jnp.minimum(xs_neg + clip, 1.0)
    loss = y * jnp.log(jnp.maximum(xs_pos, eps))
    loss = loss + anti * jnp.log(jnp.maximum(xs_neg, eps))
    if gamma_neg > 0 or gamma_pos > 0:
        xs_pos = xs_pos * y
        xs_neg = xs_neg * anti
        w = jnp.power(1.0 - xs_pos - xs_neg, gamma_pos * y + gamma_neg * anti)
        loss = loss * w
    return -loss


if __name__ == "__main__":
    key = jax.random.PRNGKey(0)
    k1, k2, k3, k4, k5, k6 = jax.random.split(key, 6)

    # 1) Typical multi-label shape with an unaligned label dim (COCO-style 80 classes):
    #    exercises the full-extent column block (no pad round trip).
    B, L = 8, 80
    x = 3.0 * jax.random.normal(k1, (B, L), dtype=jnp.float32)
    y = (jax.random.uniform(k2, (B, L)) < 0.3).astype(jnp.float32)
    out = jax.block_until_ready(asymmetric_loss_optimized(x, y))
    ref = _reference(x, y)
    assert out.shape == x.shape
    assert jnp.allclose(out, ref, atol=1e-4, rtol=1e-5), (
        float(jnp.max(jnp.abs(out - ref))))

    # 2) Lane-aligned shape: exercises the byte-budgeted / row-split (>=2 blocks) path.
    xb = 3.0 * jax.random.normal(k3, (16, 128), dtype=jnp.float32)
    yb = (jax.random.uniform(k4, (16, 128)) < 0.3).astype(jnp.float32)
    outb = jax.block_until_ready(asymmetric_loss_optimized(xb, yb))
    refb = _reference(xb, yb)
    assert jnp.allclose(outb, refb, atol=1e-4, rtol=1e-5)

    # 3) Soft (non-binary) targets through the exact general fallback path.
    xs = 3.0 * jax.random.normal(k5, (4, 40), dtype=jnp.float32)
    ys = jax.random.uniform(k6, (4, 40), dtype=jnp.float32)
    outs = jax.block_until_ready(
        asymmetric_loss_optimized(xs, ys, assume_binary_targets=False))
    refs = _reference(xs, ys)
    assert jnp.allclose(outs, refs, atol=1e-4, rtol=1e-5)

    print("KERNEL_OK")
</pallas_src>

<mosaic_0001>
module attributes {stable_mosaic.version = 11 : i64} {
  func.func @_asl_kernel(%arg0: i32, %arg1: i32, %arg2: memref<8x80xf32, #tpu.memory_space<vmem>>, %arg3: memref<8x80xf32, #tpu.memory_space<vmem>>, %arg4: memref<8x80xf32, #tpu.memory_space<vmem>>) attributes {dimension_semantics = [#tpu.dimension_semantics<parallel>, #tpu.dimension_semantics<parallel>], iteration_bounds = array<i64: 1, 1>, scalar_prefetch = 0 : i64, scratch_operands = 0 : i64, tpu.core_type = #tpu.core_type<tc>, window_params = [{transform_indices = @transform_0, window_bounds = array<i64: 8, 80>}, {transform_indices = @transform_1, window_bounds = array<i64: 8, 80>}, {transform_indices = @transform_2, window_bounds = array<i64: 8, 80>}]} {
    %c0 = arith.constant 0 : index
    %c0_0 = arith.constant 0 : index
    %0 = vector.load %arg2[%c0, %c0_0] : memref<8x80xf32, #tpu.memory_space<vmem>>, vector<8x80xf32>
    %c0_1 = arith.constant 0 : index
    %c0_2 = arith.constant 0 : index
    %1 = vector.load %arg3[%c0_1, %c0_2] : memref<8x80xf32, #tpu.memory_space<vmem>>, vector<8x80xf32>
    %2 = arith.negf %0 : vector<8x80xf32>
    %3 = math.exp %2 : vector<8x80xf32>
    %cst = arith.constant 1.000000e+00 : f32
    %4 = vector.broadcast %cst : f32 to vector<8x80xf32>
    %5 = arith.addf %4, %3 : vector<8x80xf32>
    %6 = arith.divf %4, %5 : vector<8x80xf32>
    %cst_3 = arith.constant 1.000000e+00 : f32
    %7 = vector.broadcast %cst_3 : f32 to vector<8x80xf32>
    %8 = arith.subf %7, %6 : vector<8x80xf32>
    %cst_4 = arith.constant 5.000000e-02 : f32
    %9 = vector.broadcast %cst_4 : f32 to vector<8x80xf32>
    %10 = arith.addf %8, %9 : vector<8x80xf32>
    %cst_5 = arith.constant 1.000000e+00 : f32
    %11 = vector.broadcast %cst_5 : f32 to vector<8x80xf32>
    %12 = arith.minimumf %10, %11 : vector<8x80xf32>
    %cst_6 = arith.constant 0.000000e+00 : f32
    %13 = vector.broadcast %cst_6 : f32 to vector<8x80xf32>
    %14 = arith.cmpf ogt, %1, %13 : vector<8x80xf32>
    %15 = arith.select %14, %6, %12 : vector<8x80xi1>, vector<8x80xf32>
    %cst_7 = arith.constant 9.99999993E-9 : f32
    %16 = vector.broadcast %cst_7 : f32 to vector<8x80xf32>
    %17 = arith.maximumf %15, %16 : vector<8x80xf32>
    %18 = math.log %17 : vector<8x80xf32>
    %cst_8 = arith.constant 1.000000e+00 : f32
    %19 = vector.broadcast %cst_8 : f32 to vector<8x80xf32>
    %20 = arith.subf %19, %15 : vector<8x80xf32>
    %21 = arith.mulf %20, %20 : vector<8x80xf32>
    %22 = arith.mulf %21, %21 : vector<8x80xf32>
    %23 = arith.select %14, %20, %22 : vector<8x80xi1>, vector<8x80xf32>
    %24 = arith.mulf %18, %23 : vector<8x80xf32>
    %cst_9 = arith.constant 0.000000e+00 : f32
    %25 = vector.broadcast %cst_9 : f32 to vector<8x80xf32>
    %26 = arith.subf %25, %24 : vector<8x80xf32>
    %c0_10 = arith.constant 0 : index
    %c0_11 = arith.constant 0 : index
    %27 = vector.load %arg4[%c0_10, %c0_11] : memref<8x80xf32, #tpu.memory_space<vmem>>, vector<8x80xf32>
    tpu.vector_store %arg4[%c0_10, %c0_11], %26 {strides = array<i32>} : memref<8x80xf32, #tpu.memory_space<vmem>>, vector<8x80xf32>,
    return
  }
  func.func @transform_0(%arg0: i32, %arg1: i32) -> (i32, i32) {
    %c0_i32 = arith.constant 0 : i32
    return %arg0, %arg1 : i32, i32
  }
  func.func @transform_1(%arg0: i32, %arg1: i32) -> (i32, i32) {
    %c0_i32 = arith.constant 0 : i32
    return %arg0, %arg1 : i32, i32
  }
  func.func @transform_2(%arg0: i32, %arg1: i32) -> (i32, i32) {
    %c0_i32 = arith.constant 0 : i32
    return %arg0, %arg1 : i32, i32
  }
}

</mosaic_0001>

<llo_original>
// kernel: tpu_custom_call.1
$region0: #{tpu_custom_call.1}
  #allocation0 [shape = 'u32[]', space=smem, size = 0x4, offset = 0x4, fixed_abs, tag = 'smem constant byte address 0x4 - core index']
  #allocation1 [shape = 'u32[72,128]{1,0:T(1,128)}', space=vmem, size = 0x9000, scoped, tag = 'internal scratch']
  %s0 = inlined_call_operand.hbm [shape: f32[8,80], index: 0, kind: input, shape index: {}]
  %s1 = inlined_call_operand.hbm [shape: f32[8,80], index: 1, kind: input, shape index: {}]
  %s2 = inlined_call_operand.hbm [shape: f32[8,80], index: 2, kind: output, shape index: {}]
  %s3 = sld [smem:[#allocation0]]
  $region26: #{tpu_custom_call.1} parent=0
    _
  %s5 = ssub.s32 1, %s3
  %s6 = scalar_select 0, %s5, %s3
  $region1: #{tpu_custom_call.1} parent=0
    #allocation2 [shape = 'u8[4096]{0}', space=vmem, size = 0x1000, scoped, tag = 'input window, operand 0, single buffered']
    #allocation3 [shape = 's32[1]{0}', space=sflag, size = 0x4, scoped, tag = 'scoped memory for tpu_custom_call.1']
    #allocation4 [shape = 's32[1]{0}', space=sflag, size = 0x4, scoped, tag = 'scoped memory for tpu_custom_call.1']
    #allocation5 [shape = 'u8[4096]{0}', space=vmem, size = 0x1000, scoped, tag = 'input window, operand 1, single buffered']
    #allocation6 [shape = 's32[1]{0}', space=sflag, size = 0x4, scoped, tag = 'scoped memory for tpu_custom_call.1']
    #allocation7 [shape = 'u8[4096]{0}', space=vmem, size = 0x1000, scoped, tag = 'output window, operand 0, single buffered']
    %7 = vsyncpa [#allocation3], 0
    %8 = vsyncpa [#allocation6], 0
    %9 = vsyncpa [#allocation4], 0
    // Predicated region
    $region2: #{tpu_custom_call.1} parent=1 // pred_check
      _
    $region3: #{tpu_custom_call.1} parent=1 // pred_check_branch
      %11 = sbr.rel (0) target = $region5
    $region4: #{tpu_custom_call.1} parent=1 // pred_region
      %13 = vsyncadd [#allocation3], 0
      %s15 = sshll.u32 %s0, 4
      %s16 = int_to_ptr.hbm [resolvable:$true] %s15
      %s17 = sshll.u32 [#allocation2], 4
      %s18 = int_to_ptr.vmem [resolvable:$true] %s17
      %20 = dma.hbm_to_vmem [thread:$0]  %s16, 128, %s18, [#allocation3]
    $region5: #{tpu_custom_call.1} parent=1 // pred_fallthru
      _
    // Predicated region
    $region6: #{tpu_custom_call.1} parent=1 // pred_check
      _
    $region7: #{tpu_custom_call.1} parent=1 // pred_check_branch
      %22 = sbr.rel (0) target = $region9
    $region8: #{tpu_custom_call.1} parent=1 // pred_region
      %24 = vsyncadd [#allocation6], 0
      %s26 = sshll.u32 %s1, 4
      %s27 = int_to_ptr.hbm [resolvable:$true] %s26
      %s28 = sshll.u32 [#allocation5], 4
      %s29 = int_to_ptr.vmem [resolvable:$true] %s28
      %31 = dma.hbm_to_vmem [thread:$0]  %s27, 128, %s29, [#allocation6]
    $region9: #{tpu_custom_call.1} parent=1 // pred_fallthru
      _
    // Predicated region
    $region10: #{tpu_custom_call.1} parent=1 // pred_check
      _
    $region11: #{tpu_custom_call.1} parent=1 // pred_check_branch
      %33 = sbr.rel (0) target = $region13
    $region12: #{tpu_custom_call.1} parent=1 // pred_region
      %35 = dma.done [#allocation3], 128
    $region13: #{tpu_custom_call.1} parent=1 // pred_fallthru
      _
    // Predicated region
    $region14: #{tpu_custom_call.1} parent=1 // pred_check
      _
    $region15: #{tpu_custom_call.1} parent=1 // pred_check_branch
      %37 = sbr.rel (0) target = $region17
    $region16: #{tpu_custom_call.1} parent=1 // pred_region
      %39 = dma.done [#allocation6], 128
    $region17: #{tpu_custom_call.1} parent=1 // pred_fallthru
      _
    %v40 = vld [vmem:[#allocation2] sm:$0xff]
    %v41 = vld [vmem:[#allocation5] sm:$0xff]
    %v42 = vxor.u32 %v40, 2147483648
    %v43 = vmul.f32 %v42, 1.442695
    %v44 = vpow.pop %v43
    %v45 = vadd.f32 %v44, 1.0
    %v46 = vrcp.pop %v45
    %v47 = vmul.f32 %v45, %v46
    %v48 = vsub.f32 1.0, %v47
    %v49 = vmul.f32 %v46, %v48
    %v50 = vadd.f32 %v46, %v49
    %vm51 = vweird.f32 %v45
    %vm52 = vweird.f32 %v46
    %vm53 = vmor %vm51, %vm52
    %v54 = vsel %vm53, %v46, %v50
    %v55 = vand.u32 2147483647, %v45
    %vm56 = vcmp.eq.f32.partialorder %v55, 8.507059e+37
    %v57 = vand.u32 %v45, 2147483648
    %v58 = vor.u32 1.1754944e-38, %v57
    %v59 = vsel %vm56, %v58, %v54
    %v60 = vmul.f32 1.0, %v59
    %v61 = vsub.f32 1.0, %v60
    %v62 = vadd.f32 %v61, 0.05
    %v63 = vmin.f32 %v62, 1.0
    %vm64 = vcmp.gt.f32.partialorder %v41, 0.0
    %v65 = vsel %vm64, %v60, %v63
    %v66 = vmax.f32 %v65, 1e-08
    %v67 = vlog2.pop %v66
    %v68 = vmul.f32 %v67, 0.6931472
    %v69 = vsub.f32 1.0, %v65
    %v70 = vmul.f32 %v69, %v69
    %v71 = vmul.f32 %v70, %v70
    %v72 = vsel %vm64, %v69, %v71
    %v73 = vmul.f32 %v68, %v72
    %v74 = vsub.f32 0.0, %v73
    %vm75 = vcmask 654336
    %76 = vst.msk [vmem:[#allocation7] sm:$0xff] %vm75, %v74
    // Predicated region
    $region18: #{tpu_custom_call.1} parent=1 // pred_check
      _
    $region19: #{tpu_custom_call.1} parent=1 // pred_check_branch
      %78 = sbr.rel (0) target = $region21
    $region20: #{tpu_custom_call.1} parent=1 // pred_region
      %80 = vsyncadd [#allocation4], 0
      %s82 = sshll.u32 [#allocation7], 4
      %s83 = int_to_ptr.vmem [resolvable:$true] %s82
      %s84 = sshll.u32 %s2, 4
      %s85 = int_to_ptr.hbm [resolvable:$true] %s84
      %87 = dma.vmem_to_hbm [thread:$0]  %s83, 128, %s85, [#allocation4]
    $region21: #{tpu_custom_call.1} parent=1 // pred_fallthru
      _
    // Predicated region
    $region22: #{tpu_custom_call.1} parent=1 // pred_check
      _
    $region23: #{tpu_custom_call.1} parent=1 // pred_check_branch
      %89 = sbr.rel (0) target = $region25
    $region24: #{tpu_custom_call.1} parent=1 // pred_region
      %91 = dma.done [#allocation4], 128
    $region25: #{tpu_custom_call.1} parent=1 // pred_fallthru
      _
    %92 = vsyncpa [#allocation3], 1
    %93 = vsyncpa [#allocation6], 1
    %94 = vsyncpa [#allocation4], 1

</llo_original>
